<compile_context>
chip_gen: v7x
topology: tpu7x:2x2x1
jax: 0.10.0
libtpu: 0.0.40
codegen_flags: <defaults>
</compile_context>

<pallas_src>
import numpy as np
import jax
import jax.numpy as jnp
from jax.experimental import pallas as pl
from jax.experimental.pallas import tpu as pltpu


def _round_up(x: int, m: int) -> int:
    return ((x + m - 1) // m) * m


def _cdiv(x: int, m: int) -> int:
    return (x + m - 1) // m


def _make_unhappy_kernel(n_valid: int, tm: int, tn: int,
                         mask_needed: bool, rhs_bf16: bool):
    """Builds the grid-step kernel.

    mat_ref  : (tm, tn)      VMEM tile of the Laplacian-like matrix
    prob_ref : (n_prob, K)   VMEM full (padded) prob, resident across the grid
    out_ref  : (1, 8, 128)   VMEM lane-dense per-row-block partial
    acc_ref  : (tm, K)       VMEM f32 accumulator scratch
    """

    def kernel(mat_ref, prob_ref, out_ref, acc_ref):
        i = pl.program_id(0)
        j = pl.program_id(1)
        nj = pl.num_programs(1)

        # Per-row-block accumulator: zero at the first column block.
        @pl.when(j == 0)
        def _():
            acc_ref[...] = jnp.zeros_like(acc_ref)

        row0 = pl.multiple_of(i * tm, tm)
        col0 = pl.multiple_of(j * tn, tn)

        mat_tile = mat_ref[...]
        if mask_needed:
            # Ragged edge blocks: the out-of-bounds region of the block is
            # undefined, so zero it.  Only traced when N is not tile-aligned.
            rows = row0 + jax.lax.broadcasted_iota(jnp.int32, (tm, 1), 0)
            cols = col0 + jax.lax.broadcasted_iota(jnp.int32, (1, tn), 1)
            valid = jnp.logical_and(rows < n_valid, cols < n_valid)
            mat_tile = jnp.where(valid, mat_tile, jnp.zeros_like(mat_tile))

        rhs = prob_ref[pl.ds(col0, tn), :]        # (tn, K) matmul RHS slice
        lhs_rows = prob_ref[pl.ds(row0, tm), :]   # (tm, K) rows of this block

        if rhs_bf16:
            # Single-pass bf16 MXU matmul (mat is already bf16 in HBM).
            rhs = rhs.astype(jnp.bfloat16)

        # (tm, tn) @ (tn, K) -> (tm, K), f32 accumulation on the MXU.
        mp = jnp.dot(mat_tile, rhs, preferred_element_type=jnp.float32)

        # Pure VPU multiply-add into the persistent accumulator; the
        # cross-lane / cross-sublane reduce is deferred to the last j step.
        acc_ref[...] += mp * lhs_rows

        @pl.when(j == nj - 1)
        def _():
            partial = jnp.sum(acc_ref[...])
            # Lane-dense full-block store (unmasked vst); the wrapper reads
            # element [i, 0, 0].
            out_ref[...] = jnp.broadcast_to(partial, out_ref.shape).astype(
                out_ref.dtype)

    return kernel


def unhappy_ratio_pallas(mat: jax.Array, prob: jax.Array, num_edges: int, *,
                         tm: int | None = None, tn: int | None = None,
                         mat_dtype=jnp.bfloat16,
                         vmem_limit_bytes: int | None = None) -> jax.Array:
    """Returns a shape-(1,) float32 array matching the PyTorch module output."""
    N, K = prob.shape
    assert mat.shape == (N, N)

    # In the real module `mat` is a constant built in __init__; cast it to the
    # streaming dtype once there so this conversion is amortized across calls.
    mat = mat.astype(mat_dtype)
    prob = prob.astype(jnp.float32)

    # Tiny-N fallback: pad everything up to one (128, 128) aligned tile
    # (negligible cost at this size, keeps block shapes legal).
    if N < 128:
        pad = 128 - N
        mat = jnp.pad(mat, ((0, pad), (0, pad)))
        prob = jnp.pad(prob, ((0, pad), (0, 0)))
        n_eff = 128
    else:
        n_eff = N

    # Big tiles amortize the ~0.35us per-grid-step overhead; a double-buffered
    # 1024x1024 tile is 4 MiB (bf16) / 8 MiB (f32), fine even on v7x (64 MiB).
    tile_default = min(1024, _round_up(n_eff, 128))
    if tm is None:
        tm = tile_default
    if tn is None:
        tn = tile_default
    assert tm % 8 == 0 and tn % 128 == 0, "tm must be multiple of 8, tn of 128"

    ni = _cdiv(n_eff, tm)
    nj = _cdiv(n_eff, tn)
    mask_needed = (n_eff % tm != 0) or (n_eff % tn != 0)

    # prob is tiny: pad it (exact zeros) so the in-kernel pl.ds slices stay in
    # bounds.  mat itself is NOT padded/copied: ragged edge blocks are masked
    # in-kernel, avoiding an O(N^2) HBM pad round trip.
    n_prob = max(ni * tm, nj * tn)
    if n_prob != n_eff:
        prob = jnp.pad(prob, ((0, n_prob - n_eff), (0, 0)))

    mat_itemsize = mat.dtype.itemsize
    need = (2 * tm * tn * mat_itemsize   # double-buffered mat tile
            + 2 * n_prob * K * 4         # resident prob (worst case 2 buffers)
            + tm * K * 4                 # f32 accumulator scratch
            + 2 * 8 * 128 * 4)           # output block
    if vmem_limit_bytes is None:
        try:
            phys = int(pltpu.get_tpu_info().vmem_capacity_bytes)
        except Exception:
            phys = 64 << 20              # smallest per-TC VMEM (v7x) fallback
        vmem_limit_bytes = int(min(need + (16 << 20), int(phys * 0.75)))
    assert need <= vmem_limit_bytes, (
        f"VMEM need {need} B exceeds limit {vmem_limit_bytes} B; lower tm/tn")

    kernel = _make_unhappy_kernel(
        n_eff, tm, tn, mask_needed, rhs_bf16=(mat.dtype == jnp.bfloat16))

    cost = pl.CostEstimate(
        flops=2 * n_eff * n_eff * K,
        transcendentals=0,
        bytes_accessed=(n_eff * n_eff * mat_itemsize
                        + n_prob * K * 4 + ni * 8 * 128 * 4),
    )

    raw = pl.pallas_call(
        kernel,
        out_shape=jax.ShapeDtypeStruct((ni, 8, 128), jnp.float32),
        grid_spec=pltpu.PrefetchScalarGridSpec(
            num_scalar_prefetch=0,
            grid=(ni, nj),
            in_specs=[
                # mat tile: the only large / bandwidth-critical stream.
                pl.BlockSpec((tm, tn), lambda i, j: (i, j)),
                # full prob resident in VMEM; constant index -> DMA'd once.
                pl.BlockSpec((n_prob, K), lambda i, j: (0, 0)),
            ],
            out_specs=pl.BlockSpec((1, 8, 128), lambda i, j: (i, 0, 0)),
            scratch_shapes=[pltpu.VMEM((tm, K), jnp.float32)],
        ),
        compiler_params=pltpu.CompilerParams(
            # Row-block axis is parallel (v7x megacore splits it across TCs);
            # the reduction axis j stays arbitrary and innermost.
            dimension_semantics=("parallel", "arbitrary"),
            vmem_limit_bytes=vmem_limit_bytes,
        ),
        cost_estimate=cost,
    )(mat, prob)

    total = jnp.sum(raw[:, 0, 0])
    return (total / jnp.float32(num_edges)).reshape(1)


def build_mat_and_num_edges(key, n: int):
    """Deterministically build synthetic A_p, A_n and derive mat / num_edges,
    mirroring the scipy construction in __init__ (dense here)."""
    kp, kn = jax.random.split(key)
    A_p = jax.random.bernoulli(kp, p=0.10, shape=(n, n)).astype(jnp.float32)
    A_n = jax.random.bernoulli(kn, p=0.05, shape=(n, n)).astype(jnp.float32)
    eye = jnp.eye(n, dtype=jnp.float32)          # no self loops
    A_p = A_p * (1.0 - eye)
    A_n = A_n * (1.0 - eye)

    A_p_np = np.asarray(A_p)
    A_n_np = np.asarray(A_n)
    # D_p = diag(A_p.transpose().sum(axis=0)) = diag(row sums of A_p)
    D_p = np.diag(A_p_np.sum(axis=1))
    mat = D_p - (A_p_np - A_n_np)
    num_edges = int(np.count_nonzero(A_p_np - A_n_np))
    return jnp.asarray(mat, dtype=jnp.float32), num_edges


if __name__ == "__main__":
    K = 4  # number of classes

    # ---- test 1: aligned N, default bf16 streaming, single tile -------------
    N1 = 128
    k_adj, k_prob = jax.random.split(jax.random.PRNGKey(0))
    mat1, ne1 = build_mat_and_num_edges(k_adj, N1)
    assert ne1 > 0
    prob1 = jax.nn.softmax(jax.random.normal(k_prob, (N1, K), jnp.float32), -1)

    out1 = jax.block_until_ready(unhappy_ratio_pallas(mat1, prob1, ne1))
    ref1_f32 = jnp.sum((mat1 @ prob1) * prob1) / ne1
    ref1_bf16 = jnp.sum(
        jnp.dot(mat1.astype(jnp.bfloat16), prob1.astype(jnp.bfloat16),
                preferred_element_type=jnp.float32) * prob1) / ne1
    # tight check against a matching bf16-matmul reference (kernel plumbing)
    np.testing.assert_allclose(np.asarray(out1)[0], np.asarray(ref1_bf16),
                               rtol=1e-4, atol=1e-6)
    # loose check against the exact f32 reference (bf16 prob rounding only)
    np.testing.assert_allclose(np.asarray(out1)[0], np.asarray(ref1_f32),
                               rtol=3e-2, atol=3e-3)

    # ---- test 2: unaligned N, multi-block grid, exact f32 path --------------
    # exercises ragged-edge masking + per-row-block partial outputs
    N2 = 200
    mat2, ne2 = build_mat_and_num_edges(jax.random.PRNGKey(1), N2)
    prob2 = jax.nn.softmax(jax.random.normal(jax.random.PRNGKey(2), (N2, K)), -1)
    out2 = jax.block_until_ready(
        unhappy_ratio_pallas(mat2, prob2, ne2, tm=128, tn=128,
                             mat_dtype=jnp.float32))
    ref2 = jnp.sum((mat2 @ prob2) * prob2) / ne2
    np.testing.assert_allclose(np.asarray(out2)[0], np.asarray(ref2),
                               rtol=1e-5, atol=1e-5)

    # ---- test 3: aligned multi-block grid, bf16 path -------------------------
    # exercises the per-row-block partial-sum path without masking
    N3 = 384
    mat3, ne3 = build_mat_and_num_edges(jax.random.PRNGKey(3), N3)
    prob3 = jax.nn.softmax(jax.random.normal(jax.random.PRNGKey(4), (N3, K)), -1)
    out3 = jax.block_until_ready(
        unhappy_ratio_pallas(mat3, prob3, ne3, tm=128, tn=128))
    ref3_bf16 = jnp.sum(
        jnp.dot(mat3.astype(jnp.bfloat16), prob3.astype(jnp.bfloat16),
                preferred_element_type=jnp.float32) * prob3) / ne3
    np.testing.assert_allclose(np.asarray(out3)[0], np.asarray(ref3_bf16),
                               rtol=1e-4, atol=1e-6)

    print("KERNEL_OK")
</pallas_src>

<mosaic_0001>
module attributes {stable_mosaic.version = 11 : i64} {
  func.func @kernel(%arg0: i32, %arg1: i32, %arg2: memref<128x128xbf16, #tpu.memory_space<vmem>>, %arg3: memref<128x4xf32, #tpu.memory_space<vmem>>, %arg4: memref<1x8x128xf32, #tpu.memory_space<vmem>>, %arg5: memref<128x4xf32, #tpu.memory_space<vmem>>) attributes {dimension_semantics = [#tpu.dimension_semantics<parallel>, #tpu.dimension_semantics<arbitrary>], iteration_bounds = array<i64: 1, 1>, scalar_prefetch = 0 : i64, scratch_operands = 1 : i64, tpu.core_type = #tpu.core_type<tc>, window_params = [{transform_indices = @transform_0, window_bounds = array<i64: 128, 128>}, {pipeline_mode = #tpu.pipeline_mode<synchronous>, transform_indices = @transform_1, window_bounds = array<i64: 128, 4>}, {transform_indices = @transform_2, window_bounds = array<i64: 1, 8, 128>}]} {
    %c0_i32 = arith.constant 0 : i32
    %0 = arith.cmpi eq, %arg1, %c0_i32 : i32
    %1 = arith.extui %0 : i1 to i32
    %c0_i32_0 = arith.constant 0 : i32
    %2 = arith.cmpi ne, %1, %c0_i32_0 : i32
    scf.if %2 {
      %cst_11 = arith.constant 0.000000e+00 : f32
      %21 = vector.broadcast %cst_11 : f32 to vector<128x4xf32>
      %c0_12 = arith.constant 0 : index
      %c0_13 = arith.constant 0 : index
      %22 = vector.load %arg5[%c0_12, %c0_13] : memref<128x4xf32, #tpu.memory_space<vmem>>, vector<128x4xf32>
      tpu.vector_store %arg5[%c0_12, %c0_13], %21 {strides = array<i32>} : memref<128x4xf32, #tpu.memory_space<vmem>>, vector<128x4xf32>,
    } else {
    }
    %c128_i32 = arith.constant 128 : i32
    %3 = arith.muli %arg0, %c128_i32 : i32
    %4 = tpu.assume_multiple %3, 128 : i32
    %c128_i32_1 = arith.constant 128 : i32
    %5 = arith.muli %arg1, %c128_i32_1 : i32
    %6 = tpu.assume_multiple %5, 128 : i32
    %c0 = arith.constant 0 : index
    %c0_2 = arith.constant 0 : index
    %7 = vector.load %arg2[%c0, %c0_2] : memref<128x128xbf16, #tpu.memory_space<vmem>>, vector<128x128xbf16>
    %8 = arith.index_cast %6 : i32 to index
    %c0_3 = arith.constant 0 : index
    %9 = vector.load %arg3[%8, %c0_3] : memref<128x4xf32, #tpu.memory_space<vmem>>, vector<128x4xf32>
    %10 = arith.index_cast %4 : i32 to index
    %c0_4 = arith.constant 0 : index
    %11 = vector.load %arg3[%10, %c0_4] : memref<128x4xf32, #tpu.memory_space<vmem>>, vector<128x4xf32>
    %12 = arith.truncf %9 : vector<128x4xf32> to vector<128x4xbf16>
    %cst = arith.constant dense<0.000000e+00> : vector<128x4xf32>
    %13 = tpu.matmul %7, %12, %cst {dimension_numbers = #tpu.dot_dimension_numbers<[1], [0], [0], [1], [0, 0, 1, 1], [], []>} : vector<128x128xbf16>, vector<128x4xbf16>, vector<128x4xf32> -> vector<128x4xf32>
    %c0_5 = arith.constant 0 : index
    %c0_6 = arith.constant 0 : index
    %14 = vector.load %arg5[%c0_5, %c0_6] : memref<128x4xf32, #tpu.memory_space<vmem>>, vector<128x4xf32>
    %15 = arith.mulf %13, %11 : vector<128x4xf32>
    %16 = arith.addf %14, %15 : vector<128x4xf32>
    %c0_7 = arith.constant 0 : index
    %c0_8 = arith.constant 0 : index
    %17 = vector.load %arg5[%c0_7, %c0_8] : memref<128x4xf32, #tpu.memory_space<vmem>>, vector<128x4xf32>
    tpu.vector_store %arg5[%c0_7, %c0_8], %16 {strides = array<i32>} : memref<128x4xf32, #tpu.memory_space<vmem>>, vector<128x4xf32>,
    %c0_i32_9 = arith.constant 0 : i32
    %18 = arith.cmpi eq, %arg1, %c0_i32_9 : i32
    %19 = arith.extui %18 : i1 to i32
    %c0_i32_10 = arith.constant 0 : i32
    %20 = arith.cmpi ne, %19, %c0_i32_10 : i32
    scf.if %20 {
      %c0_11 = arith.constant 0 : index
      %c0_12 = arith.constant 0 : index
      %21 = vector.load %arg5[%c0_11, %c0_12] : memref<128x4xf32, #tpu.memory_space<vmem>>, vector<128x4xf32>
      %22 = vector.shape_cast %21 : vector<128x4xf32> to vector<1x128x4xf32>
      %cst_13 = arith.constant dense<0.000000e+00> : vector<1xf32>
      %23 = vector.multi_reduction <add>, %22, %cst_13 [1, 2] : vector<1x128x4xf32> to vector<1xf32>
      %24 = vector.shape_cast %23 : vector<1xf32> to vector<1x1x1xf32>
      %25 = vector.extract %24[0, 0, 0] : f32 from vector<1x1x1xf32>
      %26 = vector.broadcast %25 : f32 to vector<1x8x128xf32>
      %c0_14 = arith.constant 0 : index
      %c0_15 = arith.constant 0 : index
      %c0_16 = arith.constant 0 : index
      %27 = vector.load %arg4[%c0_14, %c0_15, %c0_16] : memref<1x8x128xf32, #tpu.memory_space<vmem>>, vector<1x8x128xf32>
      tpu.vector_store %arg4[%c0_14, %c0_15, %c0_16], %26 {strides = array<i32>} : memref<1x8x128xf32, #tpu.memory_space<vmem>>, vector<1x8x128xf32>,
    } else {
    }
    return
  }
  func.func @transform_0(%arg0: i32, %arg1: i32) -> (i32, i32) {
    %c0_i32 = arith.constant 0 : i32
    return %arg0, %arg1 : i32, i32
  }
  func.func @transform_1(%arg0: i32, %arg1: i32) -> (i32, i32) {
    %c0_i32 = arith.constant 0 : i32
    %c0_i32_0 = arith.constant 0 : i32
    %c0_i32_1 = arith.constant 0 : i32
    return %c0_i32, %c0_i32_0 : i32, i32
  }
  func.func @transform_2(%arg0: i32, %arg1: i32) -> (i32, i32, i32) {
    %c0_i32 = arith.constant 0 : i32
    %c0_i32_0 = arith.constant 0 : i32
    %c0_i32_1 = arith.constant 0 : i32
    return %arg0, %c0_i32, %c0_i32_0 : i32, i32, i32
  }
}

</mosaic_0001>

<llo_original>
// kernel: tpu_custom_call.1
$region0: #{tpu_custom_call.1}
  #allocation0 [shape = 'u32[]', space=smem, size = 0x4, offset = 0x4, fixed_abs, tag = 'smem constant byte address 0x4 - core index']
  #allocation1 [shape = 'u32[144,128]{1,0:T(1,128)}', space=vmem, size = 0x12000, scoped, tag = 'internal scratch']
  #allocation2 [shape = 'f32[128,4]{1,0:T(8,128)}', space=vmem, size = 0x10000, scoped, tag = 'scratch operand']
  %s0 = inlined_call_operand.vmem [shape: bf16[128,128], index: 0, kind: input, shape index: {}]
  %s1 = inlined_call_operand.vmem [shape: f32[128,4], index: 1, kind: input, shape index: {}]
  %s2 = inlined_call_operand.hbm [shape: f32[1,8,128], index: 2, kind: output, shape index: {}]
  %s3 = sld [smem:[#allocation0]]
  $region26: #{tpu_custom_call.1} parent=0
    _
  %s5 = ssub.s32 1, %s3
  %s6 = scalar_select 0, %s5, %s3
  $region1: #{tpu_custom_call.1} parent=0
    #allocation3 [shape = 'u8[4096]{0}', space=vmem, size = 0x1000, scoped, tag = 'output window, operand 0, single buffered']
    #allocation4 [shape = 's32[1]{0}', space=sflag, size = 0x4, scoped, tag = 'scoped memory for tpu_custom_call.1']
    %7 = vsyncpa [#allocation4], 0
    // Predicated region
    $region2: #{tpu_custom_call.1} parent=1 // pred_check
      _
    $region3: #{tpu_custom_call.1} parent=1 // pred_check_branch
      %9 = sbr.rel (0) target = $region5
    $region4: #{tpu_custom_call.1} parent=1 // pred_region
      _
    $region5: #{tpu_custom_call.1} parent=1 // pred_fallthru
      _
    // Predicated region
    $region6: #{tpu_custom_call.1} parent=1 // pred_check
      _
    $region7: #{tpu_custom_call.1} parent=1 // pred_check_branch
      %11 = sbr.rel (0) target = $region9
    $region8: #{tpu_custom_call.1} parent=1 // pred_region
      _
    $region9: #{tpu_custom_call.1} parent=1 // pred_fallthru
      _
    %p13 = scmp.eq.s32.totalorder 0, 0
    // Predicated region
    $region10: #{tpu_custom_call.1} parent=1 // pred_check
      %p14 = pneg %p13
    $region11: #{tpu_custom_call.1} parent=1 // pred_check_branch
      %16 = sbr.rel (%p14) target = $region13
    $region12: #{tpu_custom_call.1} parent=1 // pred_region
      %vm17 = vcmask 31744
      %18 = vst.msk [vmem:[#allocation2] sm:$0xff] %vm17, 0.0
      %19 = vst.msk [vmem:[#allocation2 + $0x8] sm:$0xff] %vm17, 0.0
      %20 = vst.msk [vmem:[#allocation2 + $0x10] sm:$0xff] %vm17, 0.0
      %21 = vst.msk [vmem:[#allocation2 + $0x18] sm:$0xff] %vm17, 0.0
      %22 = vst.msk [vmem:[#allocation2 + $0x20] sm:$0xff] %vm17, 0.0
      %23 = vst.msk [vmem:[#allocation2 + $0x28] sm:$0xff] %vm17, 0.0
      %24 = vst.msk [vmem:[#allocation2 + $0x30] sm:$0xff] %vm17, 0.0
      %25 = vst.msk [vmem:[#allocation2 + $0x38] sm:$0xff] %vm17, 0.0
      %26 = vst.msk [vmem:[#allocation2 + $0x40] sm:$0xff] %vm17, 0.0
      %27 = vst.msk [vmem:[#allocation2 + $0x48] sm:$0xff] %vm17, 0.0
      %28 = vst.msk [vmem:[#allocation2 + $0x50] sm:$0xff] %vm17, 0.0
      %29 = vst.msk [vmem:[#allocation2 + $0x58] sm:$0xff] %vm17, 0.0
      %30 = vst.msk [vmem:[#allocation2 + $0x60] sm:$0xff] %vm17, 0.0
      %31 = vst.msk [vmem:[#allocation2 + $0x68] sm:$0xff] %vm17, 0.0
      %32 = vst.msk [vmem:[#allocation2 + $0x70] sm:$0xff] %vm17, 0.0
      %33 = vst.msk [vmem:[#allocation2 + $0x78] sm:$0xff] %vm17, 0.0
    $region13: #{tpu_custom_call.1} parent=1 // pred_fallthru
      _
    %s34 = smul.u32 0, 128
    %s35 = smul.u32 0, 128
    %v36 = vld [vmem:[%s0] sm:$0xf]
    %v37 = vld [vmem:[%s0 + $0x4] sm:$0xf]
    %v38 = vld [vmem:[%s0 + $0x8] sm:$0xf]
    %v39 = vld [vmem:[%s0 + $0xc] sm:$0xf]
    %v40 = vld [vmem:[%s0 + $0x10] sm:$0xf]
    %v41 = vld [vmem:[%s0 + $0x14] sm:$0xf]
    %v42 = vld [vmem:[%s0 + $0x18] sm:$0xf]
    %v43 = vld [vmem:[%s0 + $0x1c] sm:$0xf]
    %v44 = vld [vmem:[%s0 + $0x20] sm:$0xf]
    %v45 = vld [vmem:[%s0 + $0x24] sm:$0xf]
    %v46 = vld [vmem:[%s0 + $0x28] sm:$0xf]
    %v47 = vld [vmem:[%s0 + $0x2c] sm:$0xf]
    %v48 = vld [vmem:[%s0 + $0x30] sm:$0xf]
    %v49 = vld [vmem:[%s0 + $0x34] sm:$0xf]
    %v50 = vld [vmem:[%s0 + $0x38] sm:$0xf]
    %v51 = vld [vmem:[%s0 + $0x3c] sm:$0xf]
    %s52 = scalar_lea.vmem %s1, %s35
    %v53 = vld [vmem:[%s52] sm:$0xff]
    %v54 = vld [vmem:[%s52 + $0x8] sm:$0xff]
    %v55 = vld [vmem:[%s52 + $0x10] sm:$0xff]
    %v56 = vld [vmem:[%s52 + $0x18] sm:$0xff]
    %v57 = vld [vmem:[%s52 + $0x20] sm:$0xff]
    %v58 = vld [vmem:[%s52 + $0x28] sm:$0xff]
    %v59 = vld [vmem:[%s52 + $0x30] sm:$0xff]
    %v60 = vld [vmem:[%s52 + $0x38] sm:$0xff]
    %v61 = vld [vmem:[%s52 + $0x40] sm:$0xff]
    %v62 = vld [vmem:[%s52 + $0x48] sm:$0xff]
    %v63 = vld [vmem:[%s52 + $0x50] sm:$0xff]
    %v64 = vld [vmem:[%s52 + $0x58] sm:$0xff]
    %v65 = vld [vmem:[%s52 + $0x60] sm:$0xff]
    %v66 = vld [vmem:[%s52 + $0x68] sm:$0xff]
    %v67 = vld [vmem:[%s52 + $0x70] sm:$0xff]
    %v68 = vld [vmem:[%s52 + $0x78] sm:$0xff]
    %s69 = scalar_lea.vmem %s1, %s34
    %v70 = vld [vmem:[%s69] sm:$0xff]
    %v71 = vld [vmem:[%s69 + $0x8] sm:$0xff]
    %v72 = vld [vmem:[%s69 + $0x10] sm:$0xff]
    %v73 = vld [vmem:[%s69 + $0x18] sm:$0xff]
    %v74 = vld [vmem:[%s69 + $0x20] sm:$0xff]
    %v75 = vld [vmem:[%s69 + $0x28] sm:$0xff]
    %v76 = vld [vmem:[%s69 + $0x30] sm:$0xff]
    %v77 = vld [vmem:[%s69 + $0x38] sm:$0xff]
    %v78 = vld [vmem:[%s69 + $0x40] sm:$0xff]
    %v79 = vld [vmem:[%s69 + $0x48] sm:$0xff]
    %v80 = vld [vmem:[%s69 + $0x50] sm:$0xff]
    %v81 = vld [vmem:[%s69 + $0x58] sm:$0xff]
    %v82 = vld [vmem:[%s69 + $0x60] sm:$0xff]
    %v83 = vld [vmem:[%s69 + $0x68] sm:$0xff]
    %v84 = vld [vmem:[%s69 + $0x70] sm:$0xff]
    %v85 = vld [vmem:[%s69 + $0x78] sm:$0xff]
    %v86 = vpack.c.bf16 %v54, %v53
    %v87 = vpack.c.bf16 %v56, %v55
    %v88 = vpack.c.bf16 %v58, %v57
    %v89 = vpack.c.bf16 %v60, %v59
    %v90 = vpack.c.bf16 %v62, %v61
    %v91 = vpack.c.bf16 %v64, %v63
    %v92 = vpack.c.bf16 %v66, %v65
    %v93 = vpack.c.bf16 %v68, %v67
    %v110 = vunpack.c.l.b16 %v36
    %v111 = vunpack.c.l.b16 %v37
    %v112 = vunpack.c.l.b16 %v38
    %v113 = vunpack.c.l.b16 %v39
    %v114 = vunpack.c.l.b16 %v40
    %v115 = vunpack.c.l.b16 %v41
    %v116 = vunpack.c.l.b16 %v42
    %v117 = vunpack.c.l.b16 %v43
    %v118 = vunpack.c.l.b16 %v44
    %v119 = vunpack.c.l.b16 %v45
    %v120 = vunpack.c.l.b16 %v46
    %v121 = vunpack.c.l.b16 %v47
    %v122 = vunpack.c.l.b16 %v48
    %v123 = vunpack.c.l.b16 %v49
    %v124 = vunpack.c.l.b16 %v50
    %v125 = vunpack.c.l.b16 %v51
    %v126 = vpack.c.b16 %v111, %v110
    %v127 = vpack.c.b16 %v113, %v112
    %v128 = vpack.c.b16 %v115, %v114
    %v129 = vpack.c.b16 %v117, %v116
    %v130 = vpack.c.b16 %v119, %v118
    %v131 = vpack.c.b16 %v121, %v120
    %v132 = vpack.c.b16 %v123, %v122
    %v133 = vpack.c.b16 %v125, %v124
    %142 = vmatprep.subr.bf16.mxu0 0
    %143 = vmatpush1.bf16.msra.mxu0 %v86
    %144 = vmatprep.subr.bf16.mxu0 0
    %145 = vmatpush1.bf16.msra.mxu0 %v87
    %146 = vmatprep.subr.bf16.mxu0 0
    %147 = vmatpush1.bf16.msra.mxu0 %v88
    %148 = vmatprep.subr.bf16.mxu0 0
    %149 = vmatpush1.bf16.msra.mxu0 %v89
    %150 = vmatprep.subr.bf16.mxu0 0
    %151 = vmatpush1.bf16.msra.mxu0 %v90
    %152 = vmatprep.subr.bf16.mxu0 0
    %153 = vmatpush1.bf16.msra.mxu0 %v91
    %154 = vmatprep.subr.bf16.mxu0 0
    %155 = vmatpush1.bf16.msra.mxu0 %v92
    %156 = vmatprep.subr.bf16.mxu0 0
    %157 = vmatpush1.bf16.msra.mxu0 %v93
    %158 = vmatprep.subr.bf16.mxu0 0
    %159 = vmatpush1.bf16.msra.mxu0 0
    %160 = vmatprep.subr.bf16.mxu0 0
    %161 = vmatpush1.bf16.msra.mxu0 0
    %162 = vmatprep.subr.bf16.mxu0 0
    %163 = vmatpush1.bf16.msra.mxu0 0
    %164 = vmatprep.subr.bf16.mxu0 0
    %165 = vmatpush1.bf16.msra.mxu0 0
    %166 = vmatprep.subr.bf16.mxu0 0
    %167 = vmatpush1.bf16.msra.mxu0 0
    %168 = vmatprep.subr.bf16.mxu0 0
    %169 = vmatpush1.bf16.msra.mxu0 0
    %170 = vmatprep.subr.bf16.mxu0 0
    %171 = vmatpush1.bf16.msra.mxu0 0
    %172 = vmatprep.subr.bf16.mxu0 0
    %173 = vmatpush1.bf16.msra.mxu0 0
    %174 = vmatprep.mubr.bf16.mxu0 0
    %175 = vmatmul.mubr.bf16.gmra.mrb[0].mxu0 %v126
    %v176 = vpop.f32.mrb[0].mxu0
    %v177 = vadd.f32 0.0, %v176
    %v178 = vpop.f32.mrb[0].mxu0
    %v179 = vpop.f32.mrb[0].mxu0
    %v180 = vadd.f32 0.0, %v179
    %v181 = vpop.f32.mrb[0].mxu0
    %182 = vmatprep.mubr.bf16.mxu0 0
    %183 = vmatmul.mubr.bf16.gmra.mrb[0].mxu0 %v127
    %v184 = vpop.f32.mrb[0].mxu0
    %v185 = vadd.f32 0.0, %v184
    %v186 = vpop.f32.mrb[0].mxu0
    %v187 = vpop.f32.mrb[0].mxu0
    %v188 = vadd.f32 0.0, %v187
    %v189 = vpop.f32.mrb[0].mxu0
    %190 = vmatprep.mubr.bf16.mxu0 0
    %191 = vmatmul.mubr.bf16.gmra.mrb[0].mxu0 %v128
    %v192 = vpop.f32.mrb[0].mxu0
    %v193 = vadd.f32 0.0, %v192
    %v194 = vpop.f32.mrb[0].mxu0
    %v195 = vpop.f32.mrb[0].mxu0
    %v196 = vadd.f32 0.0, %v195
    %v197 = vpop.f32.mrb[0].mxu0
    %198 = vmatprep.mubr.bf16.mxu0 0
    %199 = vmatmul.mubr.bf16.gmra.mrb[0].mxu0 %v129
    %v200 = vpop.f32.mrb[0].mxu0
    %v201 = vadd.f32 0.0, %v200
    %v202 = vpop.f32.mrb[0].mxu0
    %v203 = vpop.f32.mrb[0].mxu0
    %v204 = vadd.f32 0.0, %v203
    %v205 = vpop.f32.mrb[0].mxu0
    %206 = vmatprep.mubr.bf16.mxu0 0
    %207 = vmatmul.mubr.bf16.gmra.mrb[0].mxu0 %v130
    %v208 = vpop.f32.mrb[0].mxu0
    %v209 = vadd.f32 0.0, %v208
    %v210 = vpop.f32.mrb[0].mxu0
    %v211 = vpop.f32.mrb[0].mxu0
    %v212 = vadd.f32 0.0, %v211
    %v213 = vpop.f32.mrb[0].mxu0
    %214 = vmatprep.mubr.bf16.mxu0 0
    %215 = vmatmul.mubr.bf16.gmra.mrb[0].mxu0 %v131
    %v216 = vpop.f32.mrb[0].mxu0
    %v217 = vadd.f32 0.0, %v216
    %v218 = vpop.f32.mrb[0].mxu0
    %v219 = vpop.f32.mrb[0].mxu0
    %v220 = vadd.f32 0.0, %v219
    %v221 = vpop.f32.mrb[0].mxu0
    %222 = vmatprep.mubr.bf16.mxu0 0
    %223 = vmatmul.mubr.bf16.gmra.mrb[0].mxu0 %v132
    %v224 = vpop.f32.mrb[0].mxu0
    %v225 = vadd.f32 0.0, %v224
    %v226 = vpop.f32.mrb[0].mxu0
    %v227 = vpop.f32.mrb[0].mxu0
    %v228 = vadd.f32 0.0, %v227
    %v229 = vpop.f32.mrb[0].mxu0
    %230 = vmatprep.mubr.bf16.mxu0 0
    %231 = vmatmul.mubr.bf16.gmra.mrb[0].mxu0 %v133
    %v232 = vpop.f32.mrb[0].mxu0
    %v233 = vadd.f32 0.0, %v232
    %v234 = vpop.f32.mrb[0].mxu0
    %v235 = vpop.f32.mrb[0].mxu0
    %v236 = vadd.f32 0.0, %v235
    %v237 = vpop.f32.mrb[0].mxu0
    %238 = vdwg.mxu0
    %v239 = vld [vmem:[#allocation2] sm:$0xff]
    %v240 = vld [vmem:[#allocation2 + $0x8] sm:$0xff]
    %v241 = vld [vmem:[#allocation2 + $0x10] sm:$0xff]
    %v242 = vld [vmem:[#allocation2 + $0x18] sm:$0xff]
    %v243 = vld [vmem:[#allocation2 + $0x20] sm:$0xff]
    %v244 = vld [vmem:[#allocation2 + $0x28] sm:$0xff]
    %v245 = vld [vmem:[#allocation2 + $0x30] sm:$0xff]
    %v246 = vld [vmem:[#allocation2 + $0x38] sm:$0xff]
    %v247 = vld [vmem:[#allocation2 + $0x40] sm:$0xff]
    %v248 = vld [vmem:[#allocation2 + $0x48] sm:$0xff]
    %v249 = vld [vmem:[#allocation2 + $0x50] sm:$0xff]
    %v250 = vld [vmem:[#allocation2 + $0x58] sm:$0xff]
    %v251 = vld [vmem:[#allocation2 + $0x60] sm:$0xff]
    %v252 = vld [vmem:[#allocation2 + $0x68] sm:$0xff]
    %v253 = vld [vmem:[#allocation2 + $0x70] sm:$0xff]
    %v254 = vld [vmem:[#allocation2 + $0x78] sm:$0xff]
    %v255 = vmul.f32 %v177, %v70
    %v256 = vmul.f32 %v180, %v71
    %v257 = vmul.f32 %v185, %v72
    %v258 = vmul.f32 %v188, %v73
    %v259 = vmul.f32 %v193, %v74
    %v260 = vmul.f32 %v196, %v75
    %v261 = vmul.f32 %v201, %v76
    %v262 = vmul.f32 %v204, %v77
    %v263 = vmul.f32 %v209, %v78
    %v264 = vmul.f32 %v212, %v79
    %v265 = vmul.f32 %v217, %v80
    %v266 = vmul.f32 %v220, %v81
    %v267 = vmul.f32 %v225, %v82
    %v268 = vmul.f32 %v228, %v83
    %v269 = vmul.f32 %v233, %v84
    %v270 = vmul.f32 %v236, %v85
    %v271 = vadd.f32 %v239, %v255
    %v272 = vadd.f32 %v240, %v256
    %v273 = vadd.f32 %v241, %v257
    %v274 = vadd.f32 %v242, %v258
    %v275 = vadd.f32 %v243, %v259
    %v276 = vadd.f32 %v244, %v260
    %v277 = vadd.f32 %v245, %v261
    %v278 = vadd.f32 %v246, %v262
    %v279 = vadd.f32 %v247, %v263
    %v280 = vadd.f32 %v248, %v264
    %v281 = vadd.f32 %v249, %v265
    %v282 = vadd.f32 %v250, %v266
    %v283 = vadd.f32 %v251, %v267
    %v284 = vadd.f32 %v252, %v268
    %v285 = vadd.f32 %v253, %v269
    %v286 = vadd.f32 %v254, %v270
    %vm287 = vcmask 31744
    %288 = vst.msk [vmem:[#allocation2] sm:$0xff] %vm287, %v271
    %289 = vst.msk [vmem:[#allocation2 + $0x8] sm:$0xff] %vm287, %v272
    %290 = vst.msk [vmem:[#allocation2 + $0x10] sm:$0xff] %vm287, %v273
    %291 = vst.msk [vmem:[#allocation2 + $0x18] sm:$0xff] %vm287, %v274
    %292 = vst.msk [vmem:[#allocation2 + $0x20] sm:$0xff] %vm287, %v275
    %293 = vst.msk [vmem:[#allocation2 + $0x28] sm:$0xff] %vm287, %v276
    %294 = vst.msk [vmem:[#allocation2 + $0x30] sm:$0xff] %vm287, %v277
    %295 = vst.msk [vmem:[#allocation2 + $0x38] sm:$0xff] %vm287, %v278
    %296 = vst.msk [vmem:[#allocation2 + $0x40] sm:$0xff] %vm287, %v279
    %297 = vst.msk [vmem:[#allocation2 + $0x48] sm:$0xff] %vm287, %v280
    %298 = vst.msk [vmem:[#allocation2 + $0x50] sm:$0xff] %vm287, %v281
    %299 = vst.msk [vmem:[#allocation2 + $0x58] sm:$0xff] %vm287, %v282
    %300 = vst.msk [vmem:[#allocation2 + $0x60] sm:$0xff] %vm287, %v283
    %301 = vst.msk [vmem:[#allocation2 + $0x68] sm:$0xff] %vm287, %v284
    %302 = vst.msk [vmem:[#allocation2 + $0x70] sm:$0xff] %vm287, %v285
    %303 = vst.msk [vmem:[#allocation2 + $0x78] sm:$0xff] %vm287, %v286
    // Predicated region
    $region14: #{tpu_custom_call.1} parent=1 // pred_check
      %p304 = pneg %p13
    $region15: #{tpu_custom_call.1} parent=1 // pred_check_branch
      %306 = sbr.rel (%p304) target = $region17
    $region16: #{tpu_custom_call.1} parent=1 // pred_region
      %v307 = vld [vmem:[#allocation2] sm:$0xff]
      %v308 = vld [vmem:[#allocation2 + $0x8] sm:$0xff]
      %v309 = vld [vmem:[#allocation2 + $0x10] sm:$0xff]
      %v310 = vld [vmem:[#allocation2 + $0x18] sm:$0xff]
      %v311 = vld [vmem:[#allocation2 + $0x20] sm:$0xff]
      %v312 = vld [vmem:[#allocation2 + $0x28] sm:$0xff]
      %v313 = vld [vmem:[#allocation2 + $0x30] sm:$0xff]
      %v314 = vld [vmem:[#allocation2 + $0x38] sm:$0xff]
      %v315 = vld [vmem:[#allocation2 + $0x40] sm:$0xff]
      %v316 = vld [vmem:[#allocation2 + $0x48] sm:$0xff]
      %v317 = vld [vmem:[#allocation2 + $0x50] sm:$0xff]
      %v318 = vld [vmem:[#allocation2 + $0x58] sm:$0xff]
      %v319 = vld [vmem:[#allocation2 + $0x60] sm:$0xff]
      %v320 = vld [vmem:[#allocation2 + $0x68] sm:$0xff]
      %v321 = vld [vmem:[#allocation2 + $0x70] sm:$0xff]
      %v322 = vld [vmem:[#allocation2 + $0x78] sm:$0xff]
      %v323 = vsel %vm287, %v307, 0.0
      %v324 = vsel %vm287, %v308, 0.0
      %v325 = vadd.f32 %v323, %v324
      %v326 = vsel %vm287, %v309, 0.0
      %v327 = vadd.f32 %v325, %v326
      %v328 = vsel %vm287, %v310, 0.0
      %v329 = vadd.f32 %v327, %v328
      %v330 = vsel %vm287, %v311, 0.0
      %v331 = vadd.f32 %v329, %v330
      %v332 = vsel %vm287, %v312, 0.0
      %v333 = vadd.f32 %v331, %v332
      %v334 = vsel %vm287, %v313, 0.0
      %v335 = vadd.f32 %v333, %v334
      %v336 = vsel %vm287, %v314, 0.0
      %v337 = vadd.f32 %v335, %v336
      %v338 = vsel %vm287, %v315, 0.0
      %v339 = vadd.f32 %v337, %v338
      %v340 = vsel %vm287, %v316, 0.0
      %v341 = vadd.f32 %v339, %v340
      %v342 = vsel %vm287, %v317, 0.0
      %v343 = vadd.f32 %v341, %v342
      %v344 = vsel %vm287, %v318, 0.0
      %v345 = vadd.f32 %v343, %v344
      %v346 = vsel %vm287, %v319, 0.0
      %v347 = vadd.f32 %v345, %v346
      %v348 = vsel %vm287, %v320, 0.0
      %v349 = vadd.f32 %v347, %v348
      %v350 = vsel %vm287, %v321, 0.0
      %v351 = vadd.f32 %v349, %v350
      %v352 = vsel %vm287, %v322, 0.0
      %v353 = vadd.f32 %v351, %v352
      %354 = vadd.xlane.f32.xlu0 %v353
      %v355 = vpop.xlane.xlu0 %354
      %v356 = vrot.slane %v355, 4
      %v357 = vadd.f32 %v355, %v356
      %v358 = vrot.slane %v357, 2
      %v359 = vadd.f32 %v357, %v358
      %v360 = vrot.slane %v359, 1
      %v361 = vadd.f32 %v359, %v360
      %s362 = vtos %v361
      %v363 = vstv %s362
      %364 = vst [vmem:[#allocation3] sm:$0xff] %v363
    $region17: #{tpu_custom_call.1} parent=1 // pred_fallthru
      _
    // Predicated region
    $region18: #{tpu_custom_call.1} parent=1 // pred_check
      _
    $region19: #{tpu_custom_call.1} parent=1 // pred_check_branch
      %366 = sbr.rel (0) target = $region21
    $region20: #{tpu_custom_call.1} parent=1 // pred_region
      %s368 = ssub.s32 128, 128
      %369 = vsyncadd [#allocation4], %s368
      %s371 = sshll.u32 [#allocation3], 4
      %s372 = int_to_ptr.vmem [resolvable:$true] %s371
      %374 = dma.vmem_to_hbm [thread:$0]  %s372, 128, %s2, [#allocation4]
    $region21: #{tpu_custom_call.1} parent=1 // pred_fallthru
      _
    // Predicated region
    $region22: #{tpu_custom_call.1} parent=1 // pred_check
      _
    $region23: #{tpu_custom_call.1} parent=1 // pred_check_branch
      %376 = sbr.rel (0) target = $region25
    $region24: #{tpu_custom_call.1} parent=1 // pred_region
      %377 = dma.done [#allocation4], 128
    $region25: #{tpu_custom_call.1} parent=1 // pred_fallthru
      _
    %378 = vsyncpa [#allocation4], 1

</llo_original>
